<compile_context>
chip_gen: v7x
topology: tpu7x:2x2x1
jax: 0.10.0
libtpu: 0.0.40
codegen_flags: <defaults>
</compile_context>

<pallas_src>
import functools

import jax
import jax.numpy as jnp
from jax.experimental import pallas as pl
from jax.experimental.pallas import tpu as pltpu


def _reweighting_ce_kernel(logits_ref, target_ref, loss_ref, *, block_rows, n_rows):
    logits = logits_ref[...]          # (bn, C), native dtype
    target = target_ref[...]          # (bn, C), native dtype
    bn, C = target.shape

    # Only the exp/log path needs f32; keep target in its native dtype.
    logits_f = logits.astype(jnp.float32)

    # log-sum-exp along the class (lane) axis
    m = jnp.max(logits_f, axis=1, keepdims=True)                          # (bn, 1)
    lse = jnp.log(jnp.sum(jnp.exp(logits_f - m), axis=1, keepdims=True))  # (bn, 1)

    # argmax(target) along classes (first maximal class, matching jnp.argmax),
    # then pick that logit directly instead of materializing a one-hot times a
    # full log-softmax.
    col = jax.lax.broadcasted_iota(jnp.int32, (bn, C), 1)
    mx = jnp.max(target, axis=1, keepdims=True)                           # native dtype
    first_idx = jnp.min(jnp.where(target == mx, col, C),
                        axis=1, keepdims=True)                            # (bn, 1)
    picked = jnp.sum(jnp.where(col == first_idx, logits_f, 0.0),
                     axis=1, keepdims=True)                               # (bn, 1)

    # weights: 1 where target[:, 0] == 1, else -target[:, 0]
    # (compare in the target's native dtype so upcasting can't flip the branch)
    t0 = target[:, 0:1]
    t0_f = t0.astype(jnp.float32)
    w = jnp.where(t0 == jnp.ones_like(t0), jnp.ones_like(t0_f), -t0_f)

    # Mask tail rows of the ragged last block (they are never written back to
    # HBM, but masking keeps all intermediate values finite).
    row = pl.program_id(0) * block_rows + jax.lax.broadcasted_iota(
        jnp.int32, (bn, 1), 0)
    loss = jnp.where(row < n_rows, (m + lse - picked) * w, 0.0)

    # sum(-log_softmax(logits) * onehot, axis=1) * w == (m + lse - picked) * w
    loss_ref[...] = loss


def reweighting_ce(logits, target, reduction="mean"):
    N, C = logits.shape
    assert target.shape == (N, C)

    itemsize = jnp.dtype(logits.dtype).itemsize

    # ---- tile selection from the true VMEM footprint -----------------------
    # In-VMEM layout pads the class axis to 128 lanes and the (block_n, 1)
    # f32 output block to 128 lanes as well; everything is double-buffered.
    c_pad = ((C + 127) // 128) * 128
    sub_mult = {4: 8, 2: 16, 1: 32}.get(itemsize, 8)        # sublane packing
    bytes_per_row = 2 * (2 * c_pad * itemsize) + 2 * (128 * 4)
    vmem_budget = 24 * 1024 * 1024                          # safe on v7x (64 MiB)
    cap_rows = max(16, (vmem_budget // bytes_per_row // 16) * 16)

    if N <= cap_rows:
        block_n = N                      # single block; full-dim block is legal
    else:
        block_n = int(cap_rows)          # multiple of 16; ragged tail handled

    # Ensure >= 2 grid steps for megacore (v7x: 2 TensorCores) when N is large.
    if N >= 1024 and pl.cdiv(N, block_n) < 2:
        block_n = ((pl.cdiv(N, 2) + 15) // 16) * 16

    num_blocks = pl.cdiv(N, block_n)

    # ---- VMEM limit from the actual (padded) footprint ----------------------
    n_sub = ((block_n + sub_mult - 1) // sub_mult) * sub_mult
    vmem_needed = 2 * (2 * n_sub * c_pad * itemsize) + 2 * (n_sub * 128 * 4)
    vmem_limit = int(min(max(int(vmem_needed * 1.4) + (2 << 20), 16 << 20),
                         40 << 20))

    cost = pl.CostEstimate(
        flops=8 * N * C,
        transcendentals=N * (C + 1),                 # exp per element + log per row
        bytes_accessed=2 * N * C * itemsize + N * 4,  # no pad copies anymore
    )

    kernel = functools.partial(_reweighting_ce_kernel,
                               block_rows=block_n, n_rows=N)

    # TODO(synk): for very large C (tens of thousands of classes) add a class-axis
    # grid dim with a two-pass / online LSE instead of loading full rows.
    per_row = pl.pallas_call(
        kernel,
        out_shape=jax.ShapeDtypeStruct((N, 1), jnp.float32),
        grid_spec=pltpu.PrefetchScalarGridSpec(
            num_scalar_prefetch=0,
            grid=(num_blocks,),
            in_specs=[
                pl.BlockSpec((block_n, C), lambda i: (i, 0)),
                pl.BlockSpec((block_n, C), lambda i: (i, 0)),
            ],
            out_specs=pl.BlockSpec((block_n, 1), lambda i: (i, 0)),
        ),
        compiler_params=pltpu.CompilerParams(
            dimension_semantics=("parallel",),        # rows are independent
            vmem_limit_bytes=vmem_limit,
        ),
        cost_estimate=cost,
    )(logits, target)

    loss = per_row[:, 0]

    if reduction == "none":
        return loss
    elif reduction == "sum":
        return jnp.sum(loss)
    elif reduction == "mean":
        return jnp.sum(loss) / N
    else:
        raise ValueError(
            "unrecognized option, expect reduction to be one of none, mean, sum")


def _reference(logits, target, reduction="mean"):
    # pure-JAX reference matching the PyTorch module
    N, C = target.shape
    onehot = jax.nn.one_hot(jnp.argmax(target, axis=1), C, dtype=jnp.float32)
    w = jnp.where(target[:, 0] == 1.0, 1.0, -target[:, 0])
    logp = jax.nn.log_softmax(logits, axis=1)
    loss = jnp.sum(-logp * onehot, axis=1) * w
    if reduction == "none":
        return loss
    if reduction == "sum":
        return jnp.sum(loss)
    return jnp.mean(loss)


if __name__ == "__main__":
    key = jax.random.PRNGKey(0)
    k1, k2 = jax.random.split(key)

    N, C = 16, 8  # N samples, C relation classes (small demo shape)
    logits = jax.random.normal(k1, (N, C), dtype=jnp.float32)

    # soft targets of the form [weight, ..., soft probs ...]
    target = jax.nn.softmax(jax.random.normal(k2, (N, C)), axis=1).astype(jnp.float32)
    # make a few rows exact background one-hots (target[:, 0] == 1 path)
    bg = jnp.zeros((C,), jnp.float32).at[0].set(1.0)
    target = target.at[0].set(bg).at[5].set(bg)

    for red in ("mean", "sum", "none"):
        out = jax.block_until_ready(reweighting_ce(logits, target, reduction=red))
        ref = _reference(logits, target, reduction=red)
        assert jnp.allclose(out, ref, atol=1e-5, rtol=1e-5), (red, out, ref)

    print("KERNEL_OK")
</pallas_src>

<mosaic_0001>
module attributes {stable_mosaic.version = 11 : i64} {
  func.func @_reweighting_ce_kernel(%arg0: i32, %arg1: memref<16x8xf32, #tpu.memory_space<vmem>>, %arg2: memref<16x8xf32, #tpu.memory_space<vmem>>, %arg3: memref<16x1xf32, #tpu.memory_space<vmem>>) attributes {dimension_semantics = [#tpu.dimension_semantics<parallel>], iteration_bounds = array<i64: 1>, scalar_prefetch = 0 : i64, scratch_operands = 0 : i64, tpu.core_type = #tpu.core_type<tc>, window_params = [{transform_indices = @transform_0, window_bounds = array<i64: 16, 8>}, {transform_indices = @transform_1, window_bounds = array<i64: 16, 8>}, {transform_indices = @transform_2, window_bounds = array<i64: 16, 1>}]} {
    %c0 = arith.constant 0 : index
    %c0_0 = arith.constant 0 : index
    %0 = vector.load %arg1[%c0, %c0_0] : memref<16x8xf32, #tpu.memory_space<vmem>>, vector<16x8xf32>
    %c0_1 = arith.constant 0 : index
    %c0_2 = arith.constant 0 : index
    %1 = vector.load %arg2[%c0_1, %c0_2] : memref<16x8xf32, #tpu.memory_space<vmem>>, vector<16x8xf32>
    %cst = arith.constant dense<0xFF800000> : vector<16xf32>
    %2 = vector.multi_reduction <maximumf>, %0, %cst [1] : vector<16x8xf32> to vector<16xf32>
    %3 = vector.shape_cast %2 : vector<16xf32> to vector<16x1xf32>
    %4 = vector.broadcast %3 : vector<16x1xf32> to vector<16x8xf32>
    %5 = arith.subf %0, %4 : vector<16x8xf32>
    %6 = math.exp %5 : vector<16x8xf32>
    %cst_3 = arith.constant dense<0.000000e+00> : vector<16xf32>
    %7 = vector.multi_reduction <add>, %6, %cst_3 [1] : vector<16x8xf32> to vector<16xf32>
    %8 = vector.shape_cast %7 : vector<16xf32> to vector<16x1xf32>
    %9 = math.log %8 : vector<16x1xf32>
    %10 = tpu.iota {dimensions = array<i32: 1>} : vector<16x8xi32>
    %cst_4 = arith.constant dense<0xFF800000> : vector<16xf32>
    %11 = vector.multi_reduction <maximumf>, %1, %cst_4 [1] : vector<16x8xf32> to vector<16xf32>
    %12 = vector.shape_cast %11 : vector<16xf32> to vector<16x1xf32>
    %13 = vector.broadcast %12 : vector<16x1xf32> to vector<16x8xf32>
    %14 = arith.cmpf oeq, %1, %13 : vector<16x8xf32>
    %c8_i32 = arith.constant 8 : i32
    %15 = vector.broadcast %c8_i32 : i32 to vector<16x8xi32>
    %16 = arith.select %14, %10, %15 : vector<16x8xi1>, vector<16x8xi32>
    %cst_5 = arith.constant dense<2147483647> : vector<16xi32>
    %17 = vector.multi_reduction <minsi>, %16, %cst_5 [1] : vector<16x8xi32> to vector<16xi32>
    %18 = vector.shape_cast %17 : vector<16xi32> to vector<16x1xi32>
    %19 = vector.broadcast %18 : vector<16x1xi32> to vector<16x8xi32>
    %20 = arith.cmpi eq, %10, %19 : vector<16x8xi32>
    %cst_6 = arith.constant 0.000000e+00 : f32
    %21 = vector.broadcast %cst_6 : f32 to vector<16x8xf32>
    %22 = arith.select %20, %0, %21 : vector<16x8xi1>, vector<16x8xf32>
    %cst_7 = arith.constant dense<0.000000e+00> : vector<16xf32>
    %23 = vector.multi_reduction <add>, %22, %cst_7 [1] : vector<16x8xf32> to vector<16xf32>
    %24 = vector.shape_cast %23 : vector<16xf32> to vector<16x1xf32>
    %25 = vector.extract_strided_slice %1 {offsets = [0, 0], sizes = [16, 1], strides = [1, 1]} : vector<16x8xf32> to vector<16x1xf32>
    %cst_8 = arith.constant 1.000000e+00 : f32
    %26 = vector.broadcast %cst_8 : f32 to vector<16x1xf32>
    %27 = arith.cmpf oeq, %25, %26 : vector<16x1xf32>
    %cst_9 = arith.constant 1.000000e+00 : f32
    %28 = vector.broadcast %cst_9 : f32 to vector<16x1xf32>
    %cst_10 = arith.constant 0.000000e+00 : f32
    %29 = vector.broadcast %cst_10 : f32 to vector<16x1xf32>
    %30 = arith.subf %29, %25 : vector<16x1xf32>
    %31 = arith.select %27, %28, %30 : vector<16x1xi1>, vector<16x1xf32>
    %c16_i32 = arith.constant 16 : i32
    %32 = arith.muli %arg0, %c16_i32 : i32
    %33 = tpu.iota {dimensions = array<i32: 0>} : vector<16x1xi32>
    %34 = vector.broadcast %32 : i32 to vector<16x1xi32>
    %35 = arith.addi %34, %33 : vector<16x1xi32>
    %c16_i32_11 = arith.constant 16 : i32
    %36 = vector.broadcast %c16_i32_11 : i32 to vector<16x1xi32>
    %37 = arith.cmpi slt, %35, %36 : vector<16x1xi32>
    %38 = arith.addf %3, %9 : vector<16x1xf32>
    %39 = arith.subf %38, %24 : vector<16x1xf32>
    %40 = arith.mulf %39, %31 : vector<16x1xf32>
    %cst_12 = arith.constant 0.000000e+00 : f32
    %41 = vector.broadcast %cst_12 : f32 to vector<16x1xf32>
    %42 = arith.select %37, %40, %41 : vector<16x1xi1>, vector<16x1xf32>
    %c0_13 = arith.constant 0 : index
    %c0_14 = arith.constant 0 : index
    %43 = vector.load %arg3[%c0_13, %c0_14] : memref<16x1xf32, #tpu.memory_space<vmem>>, vector<16x1xf32>
    tpu.vector_store %arg3[%c0_13, %c0_14], %42 {strides = array<i32>} : memref<16x1xf32, #tpu.memory_space<vmem>>, vector<16x1xf32>,
    return
  }
  func.func @transform_0(%arg0: i32) -> (i32, i32) {
    %c0_i32 = arith.constant 0 : i32
    %c0_i32_0 = arith.constant 0 : i32
    return %arg0, %c0_i32 : i32, i32
  }
  func.func @transform_1(%arg0: i32) -> (i32, i32) {
    %c0_i32 = arith.constant 0 : i32
    %c0_i32_0 = arith.constant 0 : i32
    return %arg0, %c0_i32 : i32, i32
  }
  func.func @transform_2(%arg0: i32) -> (i32, i32) {
    %c0_i32 = arith.constant 0 : i32
    %c0_i32_0 = arith.constant 0 : i32
    return %arg0, %c0_i32 : i32, i32
  }
}

</mosaic_0001>

<llo_original>
// kernel: tpu_custom_call.1
$region0: #{tpu_custom_call.1}
  #allocation0 [shape = 'u32[]', space=smem, size = 0x4, offset = 0x4, fixed_abs, tag = 'smem constant byte address 0x4 - core index']
  #allocation1 [shape = 'u32[144,128]{1,0:T(1,128)}', space=vmem, size = 0x12000, scoped, tag = 'internal scratch']
  %s0 = inlined_call_operand.vmem [shape: f32[16,8], index: 0, kind: input, shape index: {}]
  %s1 = inlined_call_operand.vmem [shape: f32[16,8], index: 1, kind: input, shape index: {}]
  %s2 = inlined_call_operand.vmem [shape: f32[16,1], index: 2, kind: output, shape index: {}]
  %s3 = sld [smem:[#allocation0]]
  $region18: #{tpu_custom_call.1} parent=0
    _
  %s5 = ssub.s32 1, %s3
  %s6 = scalar_select 0, %s5, %s3
  // Predicated region
  $region2: #{tpu_custom_call.1} parent=0 // pred_check
    _
  $region3: #{tpu_custom_call.1} parent=0 // pred_check_branch
    %8 = sbr.rel (0) target = $region5
  $region4: #{tpu_custom_call.1} parent=0 // pred_region
    _
  $region5: #{tpu_custom_call.1} parent=0 // pred_fallthru
    _
  // Predicated region
  $region6: #{tpu_custom_call.1} parent=0 // pred_check
    _
  $region7: #{tpu_custom_call.1} parent=0 // pred_check_branch
    %10 = sbr.rel (0) target = $region9
  $region8: #{tpu_custom_call.1} parent=0 // pred_region
    _
  $region9: #{tpu_custom_call.1} parent=0 // pred_fallthru
    _
  %v11 = vld [vmem:[%s0] sm:$0xff]
  %v12 = vld [vmem:[%s0 + $0x8] sm:$0xff]
  %v13 = vld [vmem:[%s1] sm:$0xff]
  %v14 = vld [vmem:[%s1 + $0x8] sm:$0xff]
  %vm15 = vcmask 64512
  %v16 = vsel %vm15, %v11, -inf
  %17 = vmax.xlane.f32.xlu0 %v16
  %v18 = vpop.xlane.xlu0 %17
  %v19 = vsel %vm15, %v12, -inf
  %20 = vmax.xlane.f32.xlu0 %v19
  %v21 = vpop.xlane.xlu0 %20
  %v22 = vsub.f32 %v11, %v18
  %v23 = vsub.f32 %v12, %v21
  %v24 = vmul.f32 %v22, 1.442695
  %v25 = vpow.pop %v24
  %v26 = vmul.f32 %v23, 1.442695
  %v27 = vpow.pop %v26
  %v28 = vsel %vm15, %v25, 0.0
  %29 = vadd.xlane.f32.xlu0 %v28
  %v30 = vpop.xlane.xlu0 %29
  %v31 = vsel %vm15, %v27, 0.0
  %32 = vadd.xlane.f32.xlu0 %v31
  %v33 = vpop.xlane.xlu0 %32
  %v34 = vlog2.pop %v30
  %v35 = vmul.f32 %v34, 0.6931472
  %v36 = vlog2.pop %v33
  %v37 = vmul.f32 %v36, 0.6931472
  %v38 = vlaneseq
  %v39 = vand.u32 %v38, 127
  %v40 = vsel %vm15, %v13, -inf
  %41 = vmax.xlane.f32.xlu0 %v40
  %v42 = vpop.xlane.xlu0 %41
  %v43 = vsel %vm15, %v14, -inf
  %44 = vmax.xlane.f32.xlu0 %v43
  %v45 = vpop.xlane.xlu0 %44
  %vm46 = vcmp.eq.f32.partialorder %v13, %v42
  %vm47 = vcmp.eq.f32.partialorder %v14, %v45
  %v48 = vsel %vm46, %v39, 8
  %v49 = vsel %vm47, %v39, 8
  %v50 = vsel %vm15, %v48, 2147483647
  %v51 = vand.u32 %v50, 65535
  %v52 = vshra.s32 %v50, 16
  %v53 = vcvt.s32.f32 %v51
  %v54 = vcvt.s32.f32 %v52
  %55 = vmin.xlane.f32.xlu0 %v54
  %v56 = vpop.xlane.xlu0 %55
  %vm57 = vcmp.eq.f32.partialorder %v54, %v56
  %v58 = vsel %vm57, %v53, inf
  %59 = vmin.xlane.f32.xlu0 %v58
  %v60 = vpop.xlane.xlu0 %59
  %v61 = vcvt.f32.s32 %v60
  %v62 = vcvt.f32.s32 %v56
  %v63 = vshll.u32 %v62, 16
  %v64 = vadd.s32 %v63, %v61
  %v65 = vsel %vm15, %v49, 2147483647
  %v66 = vand.u32 %v65, 65535
  %v67 = vshra.s32 %v65, 16
  %v68 = vcvt.s32.f32 %v66
  %v69 = vcvt.s32.f32 %v67
  %70 = vmin.xlane.f32.xlu0 %v69
  %v71 = vpop.xlane.xlu0 %70
  %vm72 = vcmp.eq.f32.partialorder %v69, %v71
  %v73 = vsel %vm72, %v68, inf
  %74 = vmin.xlane.f32.xlu0 %v73
  %v75 = vpop.xlane.xlu0 %74
  %v76 = vcvt.f32.s32 %v75
  %v77 = vcvt.f32.s32 %v71
  %v78 = vshll.u32 %v77, 16
  %v79 = vadd.s32 %v78, %v76
  %vm80 = vcmp.eq.s32.totalorder %v39, %v64
  %vm81 = vcmp.eq.s32.totalorder %v39, %v79
  %v82 = vsel %vm80, %v11, 0.0
  %v83 = vsel %vm81, %v12, 0.0
  %v84 = vsel %vm15, %v82, 0.0
  %85 = vadd.xlane.f32.xlu0 %v84
  %v86 = vpop.xlane.xlu0 %85
  %v87 = vsel %vm15, %v83, 0.0
  %88 = vadd.xlane.f32.xlu0 %v87
  %v89 = vpop.xlane.xlu0 %88
  %vm90 = vcmp.eq.f32.partialorder %v13, 1.0
  %vm91 = vcmp.eq.f32.partialorder %v14, 1.0
  %v92 = vsub.f32 0.0, %v13
  %v93 = vsub.f32 0.0, %v14
  %v94 = vsel %vm90, 1.0, %v92
  %v95 = vsel %vm91, 1.0, %v93
  %s96 = smul.u32 0, 16
  %v97 = vlaneseq
  %v98 = vshrl.u32 %v97, 7
  %v99 = vadd.s32 %v98, 8
  %v100 = vstv %s96
  %v101 = vadd.s32 %v100, %v98
  %v102 = vadd.s32 %v100, %v99
  %vm103 = vcmp.lt.s32.totalorder %v101, 16
  %vm104 = vcmp.lt.s32.totalorder %v102, 16
  %v105 = vadd.f32 %v18, %v35
  %v106 = vadd.f32 %v21, %v37
  %v107 = vsub.f32 %v105, %v86
  %v108 = vsub.f32 %v106, %v89
  %v109 = vmul.f32 %v107, %v94
  %v110 = vmul.f32 %v108, %v95
  %v111 = vsel %vm103, %v109, 0.0
  %v112 = vsel %vm104, %v110, 0.0
  %vm113 = vcmask 7168
  %114 = vst.msk [vmem:[%s2] sm:$0xff] %vm113, %v111
  %115 = vst.msk [vmem:[%s2 + $0x8] sm:$0xff] %vm113, %v112
  // Predicated region
  $region10: #{tpu_custom_call.1} parent=0 // pred_check
    _
  $region11: #{tpu_custom_call.1} parent=0 // pred_check_branch
    %117 = sbr.rel (0) target = $region13
  $region12: #{tpu_custom_call.1} parent=0 // pred_region
    _
  $region13: #{tpu_custom_call.1} parent=0 // pred_fallthru
    _
  // Predicated region
  $region14: #{tpu_custom_call.1} parent=0 // pred_check
    _
  $region15: #{tpu_custom_call.1} parent=0 // pred_check_branch
    %119 = sbr.rel (0) target = $region17
  $region16: #{tpu_custom_call.1} parent=0 // pred_region
    _
  $region17: #{tpu_custom_call.1} parent=0 // pred_fallthru
    _

</llo_original>
